<compile_context>
chip_gen: v6e
topology: v6e:2x2x1
jax: 0.10.0
libtpu: 0.0.40
codegen_flags: <defaults>
</compile_context>

<pallas_src>
import functools

import jax
import jax.numpy as jnp
from jax.experimental import pallas as pl
from jax.experimental.pallas import tpu as pltpu


def _round_up(n, m):
    return ((n + m - 1) // m) * m


def _row_tile(m, d, itemsize, target_bytes=1 << 20):
    """Row-tile size: ~target_bytes per block, multiple of 8 rows, and at
    least two blocks when the input allows it (feeds both v7x TensorCores)."""
    t = max(8, ((target_bytes // max(d * itemsize, 1)) // 8) * 8)
    if t >= m:
        if m >= 16:
            t = _round_up(pl.cdiv(m, 2), 8)   # >= 2 blocks for megacore
        else:
            t = m                              # single full block (legal)
    return t


def _ln_stats(x, d, eps):
    """mean and 1/(std+eps) for torch-style LayerNorm (unbiased std)."""
    # Two independent cross-lane reductions (overlap on the XLU).
    s1 = jnp.sum(x, axis=-1, keepdims=True)
    s2 = jnp.sum(x * x, axis=-1, keepdims=True)
    mean = s1 * (1.0 / d)
    denom = max(d - 1, 1)                      # guard d == 1 (torch gives nan)
    var = jnp.maximum((s2 - s1 * mean) * (1.0 / denom), 0.0)
    std = jnp.sqrt(var)
    a = std + eps                              # eps added to std (torch module)
    r = pl.reciprocal(a, approx=True)          # EUP slot
    r = r * (2.0 - a * r)                      # one Newton step -> f32 accuracy
    return mean, r


# --------------------------------------------------------------------------- #
# Kernel 1: torch-style LayerNorm over a (tm, D) row tile
# --------------------------------------------------------------------------- #
def _layernorm_kernel(x_ref, a2_ref, b2_ref, o_ref, *, eps):
    x = x_ref[...].astype(jnp.float32)                       # (tm, D)
    d = x.shape[-1]
    mean, inv = _ln_stats(x, d, eps)
    a2 = a2_ref[...].astype(jnp.float32)                     # (1, D)
    b2 = b2_ref[...].astype(jnp.float32)                     # (1, D)
    o_ref[...] = ((x - mean) * inv * a2 + b2).astype(o_ref.dtype)


def layer_norm(x, a_2, b_2, *, eps=1e-6, target_block_bytes=1 << 20):
    """x: (..., D); a_2, b_2: (D,). Torch-semantics LayerNorm (ddof=1)."""
    orig_shape = x.shape
    d = orig_shape[-1]
    m = 1
    for s in orig_shape[:-1]:
        m *= s
    x2d = x.reshape(m, d)
    itemsize = jnp.dtype(x.dtype).itemsize
    tm = _row_tile(m, d, itemsize, target_block_bytes)
    grid = (pl.cdiv(m, tm),)   # ragged last block: rows independent, writes masked

    out2d = pl.pallas_call(
        functools.partial(_layernorm_kernel, eps=eps),
        out_shape=jax.ShapeDtypeStruct((m, d), x.dtype),
        grid_spec=pltpu.PrefetchScalarGridSpec(
            num_scalar_prefetch=0,
            grid=grid,
            in_specs=[
                pl.BlockSpec((tm, d), lambda i: (i, 0)),            # x tile
                # whole-array, single-buffered parameter residency
                pl.BlockSpec(memory_space=pltpu.MemorySpace.VMEM),  # a_2
                pl.BlockSpec(memory_space=pltpu.MemorySpace.VMEM),  # b_2
            ],
            out_specs=pl.BlockSpec((tm, d), lambda i: (i, 0)),
        ),
        compiler_params=pltpu.CompilerParams(
            dimension_semantics=("parallel",)),
        cost_estimate=pl.CostEstimate(
            flops=int(10 * m * d),
            transcendentals=int(2 * m),
            bytes_accessed=int(itemsize * 2 * m * d + 8 * d)),
    )(x2d, a_2.reshape(1, d), b_2.reshape(1, d))

    return out2d.reshape(orig_shape)


# --------------------------------------------------------------------------- #
# Kernel 2 (fast path): fused LN -> dense -> +bias -> +residual
# --------------------------------------------------------------------------- #
def _fused_ln_dense_residual_kernel(x_ref, a2_ref, b2_ref, w_ref, bias_ref,
                                    o_ref, *, eps):
    x = x_ref[...].astype(jnp.float32)                        # (tm, D)
    d = x.shape[-1]
    mean, inv = _ln_stats(x, d, eps)
    a2 = a2_ref[...].astype(jnp.float32)
    b2 = b2_ref[...].astype(jnp.float32)
    normed = (x - mean) * inv * a2 + b2
    y = jnp.dot(normed.astype(w_ref.dtype), w_ref[...],
                preferred_element_type=jnp.float32)           # (tm, D) on MXU
    bias = bias_ref[...].astype(jnp.float32)                  # (1, D)
    # residual add fused in-kernel; dropout == identity (inference semantics)
    o_ref[...] = (x + y + bias).astype(o_ref.dtype)


def sublayer_connection_dense(x, a_2, b_2, w, bias, *, eps=1e-6,
                              target_block_bytes=1 << 20):
    """Fused fast path for a square dense sublayer:
        out = x + (LayerNorm(x) @ w + bias)          (dropout = identity)
    Requires w.shape == (D, D) so the residual slab matches the x tile."""
    orig_shape = x.shape
    d = orig_shape[-1]
    assert w.shape == (d, d), "fused fast path needs a square dense sublayer"
    m = 1
    for s in orig_shape[:-1]:
        m *= s
    x2d = x.reshape(m, d)
    itemsize = jnp.dtype(x.dtype).itemsize
    tm = _row_tile(m, d, itemsize, target_block_bytes)
    grid = (pl.cdiv(m, tm),)

    # TODO(synk): for large D the weight should be tiled over an N grid axis
    # (multiples of 256 on v6e/v7x, 128 on v5e) instead of a full VMEM resident.
    out2d = pl.pallas_call(
        functools.partial(_fused_ln_dense_residual_kernel, eps=eps),
        out_shape=jax.ShapeDtypeStruct((m, d), x.dtype),
        grid_spec=pltpu.PrefetchScalarGridSpec(
            num_scalar_prefetch=0,
            grid=grid,
            in_specs=[
                pl.BlockSpec((tm, d), lambda i: (i, 0)),            # x tile
                pl.BlockSpec(memory_space=pltpu.MemorySpace.VMEM),  # a_2
                pl.BlockSpec(memory_space=pltpu.MemorySpace.VMEM),  # b_2
                pl.BlockSpec(memory_space=pltpu.MemorySpace.VMEM),  # w (resident)
                pl.BlockSpec(memory_space=pltpu.MemorySpace.VMEM),  # bias
            ],
            out_specs=pl.BlockSpec((tm, d), lambda i: (i, 0)),
        ),
        compiler_params=pltpu.CompilerParams(
            dimension_semantics=("parallel",)),
        cost_estimate=pl.CostEstimate(
            flops=int(2 * m * d * d + 12 * m * d),
            transcendentals=int(2 * m),
            bytes_accessed=int(itemsize * 2 * m * d
                               + jnp.dtype(w.dtype).itemsize * d * d + 12 * d)),
    )(x2d, a_2.reshape(1, d), b_2.reshape(1, d), w, bias.reshape(1, d))

    return out2d.reshape(orig_shape)


# --------------------------------------------------------------------------- #
# SublayerConnection.forward (generic path: arbitrary JAX sublayer callable)
# --------------------------------------------------------------------------- #
def sublayer_connection(x, a_2, b_2, sublayer, *, eps=1e-6):
    """out = x + dropout(sublayer(LayerNorm(x))), dropout = identity (eval).

    LayerNorm runs in Pallas; the residual add stays in plain JAX so XLA fuses
    it into the sublayer's epilogue (no extra HBM pass through a custom call).
    Tuple returns of length 2 or 3 mirror the PyTorch module."""
    normed = layer_norm(x, a_2, b_2, eps=eps)
    out = sublayer(normed)
    # TODO(synk): training-mode dropout (pltpu.prng_*) not implemented.
    if isinstance(out, tuple) and len(out) == 2:
        return (x + out[0], out[1])
    if isinstance(out, tuple) and len(out) == 3:
        return (x + out[0], out[1], out[2])
    return x + out


# --------------------------------------------------------------------------- #
# Pure-JAX reference (mirrors the torch module)
# --------------------------------------------------------------------------- #
def _reference(x, a_2, b_2, sublayer, eps=1e-6):
    mean = jnp.mean(x, axis=-1, keepdims=True)
    var = jnp.sum((x - mean) ** 2, axis=-1, keepdims=True) / (x.shape[-1] - 1)
    std = jnp.sqrt(var)
    normed = a_2 * (x - mean) / (std + eps) + b_2
    out = sublayer(normed)
    if isinstance(out, tuple):
        return x + out[0]
    return x + out


if __name__ == "__main__":
    batch, seq, d_model = 2, 8, 128   # lane-dense feature dim (multiple of 128)

    key = jax.random.PRNGKey(0)
    kx, ka, kb, kw, kwb, kx2 = jax.random.split(key, 6)

    x = jax.random.normal(kx, (batch, seq, d_model), dtype=jnp.float32)
    a_2 = 1.0 + 0.1 * jax.random.normal(ka, (d_model,), dtype=jnp.float32)
    b_2 = 0.1 * jax.random.normal(kb, (d_model,), dtype=jnp.float32)

    # Demo dense sublayer (square, so the fused fast path also applies).
    w = jax.random.normal(kw, (d_model, d_model), dtype=jnp.float32) * 0.05
    wb = jax.random.normal(kwb, (d_model,), dtype=jnp.float32) * 0.05
    sublayer = lambda h: jnp.einsum(
        "bsd,de->bse", h, w, precision=jax.lax.Precision.HIGHEST) + wb

    ref = _reference(x, a_2, b_2, sublayer)

    # 1) Generic path: Pallas LN, sublayer + residual fused by XLA.
    out = jax.block_until_ready(sublayer_connection(x, a_2, b_2, sublayer))
    assert out.shape == (batch, seq, d_model)
    assert jnp.allclose(out, ref, atol=1e-4, rtol=1e-4), "generic path mismatch"

    # 2) Fused fast path: LN -> dense -> +bias -> +residual in one pallas_call.
    out_f = jax.block_until_ready(sublayer_connection_dense(x, a_2, b_2, w, wb))
    assert jnp.allclose(out_f, ref, atol=2e-3, rtol=2e-3), "fused path mismatch"

    # 3) Tuple-returning sublayer (e.g. attention returning weights).
    sublayer_tuple = lambda h: (sublayer(h), jnp.float32(1.0))
    out_t = sublayer_connection(x, a_2, b_2, sublayer_tuple)
    jax.block_until_ready(out_t[0])
    assert isinstance(out_t, tuple) and len(out_t) == 2
    assert jnp.allclose(out_t[0], ref, atol=1e-4, rtol=1e-4), "tuple path mismatch"

    # 4) Ragged row count (m = 21 rows -> cdiv grid with a masked tail block).
    x2 = jax.random.normal(kx2, (3, 7, d_model), dtype=jnp.float32)
    ref_r = _reference(x2, a_2, b_2, sublayer)
    out_r = jax.block_until_ready(sublayer_connection_dense(x2, a_2, b_2, w, wb))
    assert jnp.allclose(out_r, ref_r, atol=2e-3, rtol=2e-3), "ragged path mismatch"

    print("KERNEL_OK")
</pallas_src>

<mosaic_0001>
module attributes {stable_mosaic.version = 11 : i64} {
  func.func @_layernorm_kernel(%arg0: i32, %arg1: memref<8x128xf32, #tpu.memory_space<vmem>>, %arg2: memref<1x128xf32, #tpu.memory_space<vmem>>, %arg3: memref<1x128xf32, #tpu.memory_space<vmem>>, %arg4: memref<8x128xf32, #tpu.memory_space<vmem>>) attributes {dimension_semantics = [#tpu.dimension_semantics<parallel>], iteration_bounds = array<i64: 2>, scalar_prefetch = 0 : i64, scratch_operands = 0 : i64, tpu.core_type = #tpu.core_type<tc>, window_params = [{transform_indices = @transform_0, window_bounds = array<i64: 8, 128>}, {pipeline_mode = #tpu.pipeline_mode<synchronous>, transform_indices = @transform_1, window_bounds = array<i64: 1, 128>}, {pipeline_mode = #tpu.pipeline_mode<synchronous>, transform_indices = @transform_2, window_bounds = array<i64: 1, 128>}, {transform_indices = @transform_3, window_bounds = array<i64: 8, 128>}]} {
    %c0 = arith.constant 0 : index
    %c0_0 = arith.constant 0 : index
    %0 = vector.load %arg1[%c0, %c0_0] : memref<8x128xf32, #tpu.memory_space<vmem>>, vector<8x128xf32>
    %cst = arith.constant dense<0.000000e+00> : vector<8xf32>
    %1 = vector.multi_reduction <add>, %0, %cst [1] : vector<8x128xf32> to vector<8xf32>
    %2 = vector.shape_cast %1 : vector<8xf32> to vector<8x1xf32>
    %3 = arith.mulf %0, %0 : vector<8x128xf32>
    %cst_1 = arith.constant dense<0.000000e+00> : vector<8xf32>
    %4 = vector.multi_reduction <add>, %3, %cst_1 [1] : vector<8x128xf32> to vector<8xf32>
    %5 = vector.shape_cast %4 : vector<8xf32> to vector<8x1xf32>
    %cst_2 = arith.constant 7.812500e-03 : f32
    %6 = vector.broadcast %cst_2 : f32 to vector<8x1xf32>
    %7 = arith.mulf %2, %6 : vector<8x1xf32>
    %8 = arith.mulf %2, %7 : vector<8x1xf32>
    %9 = arith.subf %5, %8 : vector<8x1xf32>
    %cst_3 = arith.constant 0.00787401571 : f32
    %10 = vector.broadcast %cst_3 : f32 to vector<8x1xf32>
    %11 = arith.mulf %9, %10 : vector<8x1xf32>
    %cst_4 = arith.constant 0.000000e+00 : f32
    %12 = vector.broadcast %cst_4 : f32 to vector<8x1xf32>
    %13 = arith.maximumf %11, %12 : vector<8x1xf32>
    %14 = math.sqrt %13 : vector<8x1xf32>
    %cst_5 = arith.constant 9.99999997E-7 : f32
    %15 = vector.broadcast %cst_5 : f32 to vector<8x1xf32>
    %16 = arith.addf %14, %15 : vector<8x1xf32>
    %17 = tpu.reciprocal %16 {approx = true} : vector<8x1xf32> -> vector<8x1xf32>
    %18 = arith.mulf %16, %17 : vector<8x1xf32>
    %cst_6 = arith.constant 2.000000e+00 : f32
    %19 = vector.broadcast %cst_6 : f32 to vector<8x1xf32>
    %20 = arith.subf %19, %18 : vector<8x1xf32>
    %21 = arith.mulf %17, %20 : vector<8x1xf32>
    %c0_7 = arith.constant 0 : index
    %c0_8 = arith.constant 0 : index
    %22 = vector.load %arg2[%c0_7, %c0_8] : memref<1x128xf32, #tpu.memory_space<vmem>>, vector<1x128xf32>
    %c0_9 = arith.constant 0 : index
    %c0_10 = arith.constant 0 : index
    %23 = vector.load %arg3[%c0_9, %c0_10] : memref<1x128xf32, #tpu.memory_space<vmem>>, vector<1x128xf32>
    %24 = vector.broadcast %7 : vector<8x1xf32> to vector<8x128xf32>
    %25 = arith.subf %0, %24 : vector<8x128xf32>
    %26 = vector.broadcast %21 : vector<8x1xf32> to vector<8x128xf32>
    %27 = arith.mulf %25, %26 : vector<8x128xf32>
    %28 = vector.broadcast %22 : vector<1x128xf32> to vector<8x128xf32>
    %29 = arith.mulf %27, %28 : vector<8x128xf32>
    %30 = vector.broadcast %23 : vector<1x128xf32> to vector<8x128xf32>
    %31 = arith.addf %29, %30 : vector<8x128xf32>
    %c0_11 = arith.constant 0 : index
    %c0_12 = arith.constant 0 : index
    %32 = vector.load %arg4[%c0_11, %c0_12] : memref<8x128xf32, #tpu.memory_space<vmem>>, vector<8x128xf32>
    tpu.vector_store %arg4[%c0_11, %c0_12], %31 {strides = array<i32>} : memref<8x128xf32, #tpu.memory_space<vmem>>, vector<8x128xf32>,
    return
  }
  func.func @transform_0(%arg0: i32) -> (i32, i32) {
    %c0_i32 = arith.constant 0 : i32
    %c0_i32_0 = arith.constant 0 : i32
    return %arg0, %c0_i32 : i32, i32
  }
  func.func @transform_1(%arg0: i32) -> (i32, i32) {
    %c0_i32 = arith.constant 0 : i32
    %c0_i32_0 = arith.constant 0 : i32
    %c0_i32_1 = arith.constant 0 : i32
    return %c0_i32, %c0_i32_0 : i32, i32
  }
  func.func @transform_2(%arg0: i32) -> (i32, i32) {
    %c0_i32 = arith.constant 0 : i32
    %c0_i32_0 = arith.constant 0 : i32
    %c0_i32_1 = arith.constant 0 : i32
    return %c0_i32, %c0_i32_0 : i32, i32
  }
  func.func @transform_3(%arg0: i32) -> (i32, i32) {
    %c0_i32 = arith.constant 0 : i32
    %c0_i32_0 = arith.constant 0 : i32
    return %arg0, %c0_i32 : i32, i32
  }
}

</mosaic_0001>

<llo_original>
// kernel: tpu_custom_call.1
$region0: #{tpu_custom_call.1}
  #allocation0 [shape = 'u32[]', space=smem, size = 0x4, offset = 0x4, fixed_abs, tag = 'smem constant byte address 0x4 - core index']
  #allocation1 [shape = 'u32[144,128]{1,0:T(1,128)}', space=vmem, size = 0x12000, scoped, tag = 'internal scratch']
  %s0 = inlined_call_operand.hbm [shape: f32[16,128], index: 0, kind: input, shape index: {}]
  %s1 = inlined_call_operand.vmem [shape: f32[1,128], index: 1, kind: input, shape index: {}]
  %s2 = inlined_call_operand.vmem [shape: f32[1,128], index: 2, kind: input, shape index: {}]
  %s3 = inlined_call_operand.hbm [shape: f32[16,128], index: 3, kind: output, shape index: {}]
  %s4 = sld [smem:[#allocation0]]
  $region49: #{tpu_custom_call.1} parent=0
    _
  %s6 = ssub.s32 1, %s4
  %s7 = scalar_select 0, %s6, %s4
  $region1: #{tpu_custom_call.1} parent=0
    #allocation2 [shape = 'u8[8192]{0}', space=vmem, size = 0x2000, scoped, tag = 'input window, operand 0']
    #allocation3 [shape = 's32[2]{0}', space=sflag, size = 0x8, scoped, tag = 'scoped memory for tpu_custom_call.1']
    #allocation4 [shape = 's32[2]{0}', space=sflag, size = 0x8, scoped, tag = 'scoped memory for tpu_custom_call.1']
    #allocation5 [shape = 'u8[8192]{0}', space=vmem, size = 0x2000, scoped, tag = 'output window, operand 0']
    %8 = vsyncpa [#allocation3], 0
    %s9 = scalar_lea.sflag [#allocation3], 1
    %10 = vsyncpa %s9, 0
    %11 = vsyncpa [#allocation4], 0
    %s12 = scalar_lea.sflag [#allocation4], 1
    %13 = vsyncpa %s12, 0
    loop: start=0, step=1, limit=4
    $region2: #{tpu_custom_call.1} parent=1 // loop_pre_header
      _
    $region3: #{tpu_custom_call.1} parent=1 // loop_header
      %s15 = sphi 0, %s19
      %p16 = scmp.ge.s32.totalorder %s15, 4
      %s25 = sphi 0, %s27
      %s28 = sphi 0, %s25
      %s29 = sphi 0, %s28
      %s45 = sphi 0, %s29
      %s49 = sphi 0, %s49
      %s51 = sphi 0, %s49
      %s52 = sphi 0, %s51
      %s66 = sphi 0, %s52
      %s70 = sphi 0, %s70
      %s72 = sphi 0, %s70
      %s73 = sphi 0, %s72
      %s87 = sphi 0, %s73
      %s93 = sphi 0, %s95
      %s96 = sphi 0, %s93
      %s97 = sphi 0, %s96
      %s113 = sphi 0, %s97
    $region4: #{tpu_custom_call.1} parent=1 // loop_header_branch
      %18 = sbr.rel (%p16) target = $region8
    $region5: #{tpu_custom_call.1} parent=1 // loop_body
      %s20 = ssub.s32 %s15, 1
      %s21 = ssub.s32 %s15, 2
      %s22 = sadd.s32 %s15, 1
      %s23 = ssub.s32 %s15, %s22
      %p24 = scmp.eq.s32.totalorder %s23, 0
      %s26 = sadd.s32 %s25, 1
      %s27 = scalar_select %p24, %s25, %s26
      %p30 = pneg %p24
      %p31 = scmp.eq.s32.totalorder %s15, 1
      %p32 = por %p30, %p31
      %p33 = scmp.ne.s32.totalorder %s25, %s28
      %p34 = scmp.eq.s32.totalorder %s15, 0
      %p35 = por %p33, %p34
      %p36 = scmp.ne.s32.totalorder %s25, %s28
      %p37 = scmp.eq.s32.totalorder %s20, 1
      %p38 = por %p36, %p37
      %p39 = scmp.ne.s32.totalorder %s28, %s29
      %p40 = scmp.eq.s32.totalorder %s20, 0
      %p41 = por %p39, %p40
      %p42 = scmp.ne.s32.totalorder %s28, %s29
      %p43 = scmp.eq.s32.totalorder %s21, 1
      %p44 = por %p42, %p43
      %p46 = scmp.ne.s32.totalorder %s29, %s45
      %p47 = scmp.eq.s32.totalorder %s21, 0
      %p48 = por %p46, %p47
      %s50 = sadd.s32 %s49, 1
      %p53 = scmp.eq.s32.totalorder %s15, 1
      %p54 = scmp.ne.s32.totalorder %s49, %s51
      %p55 = scmp.eq.s32.totalorder %s15, 0
      %p56 = por %p54, %p55
      %p57 = scmp.ne.s32.totalorder %s49, %s51
      %p58 = scmp.eq.s32.totalorder %s20, 1
      %p59 = por %p57, %p58
      %p60 = scmp.ne.s32.totalorder %s51, %s52
      %p61 = scmp.eq.s32.totalorder %s20, 0
      %p62 = por %p60, %p61
      %p63 = scmp.ne.s32.totalorder %s51, %s52
      %p64 = scmp.eq.s32.totalorder %s21, 1
      %p65 = por %p63, %p64
      %p67 = scmp.ne.s32.totalorder %s52, %s66
      %p68 = scmp.eq.s32.totalorder %s21, 0
      %p69 = por %p67, %p68
      %s71 = sadd.s32 %s70, 1
      %p74 = scmp.eq.s32.totalorder %s15, 1
      %p75 = scmp.ne.s32.totalorder %s70, %s72
      %p76 = scmp.eq.s32.totalorder %s15, 0
      %p77 = por %p75, %p76
      %p78 = scmp.ne.s32.totalorder %s70, %s72
      %p79 = scmp.eq.s32.totalorder %s20, 1
      %p80 = por %p78, %p79
      %p81 = scmp.ne.s32.totalorder %s72, %s73
      %p82 = scmp.eq.s32.totalorder %s20, 0
      %p83 = por %p81, %p82
      %p84 = scmp.ne.s32.totalorder %s72, %s73
      %p85 = scmp.eq.s32.totalorder %s21, 1
      %p86 = por %p84, %p85
      %p88 = scmp.ne.s32.totalorder %s73, %s87
      %p89 = scmp.eq.s32.totalorder %s21, 0
      %p90 = por %p88, %p89
      %s91 = ssub.s32 %s15, %s22
      %p92 = scmp.eq.s32.totalorder %s91, 0
      %s94 = sadd.s32 %s93, 1
      %s95 = scalar_select %p92, %s93, %s94
      %p98 = pneg %p92
      %p99 = scmp.eq.s32.totalorder %s15, 1
      %p100 = por %p98, %p99
      %p101 = scmp.ne.s32.totalorder %s93, %s96
      %p102 = scmp.eq.s32.totalorder %s15, 0
      %p103 = por %p101, %p102
      %p104 = scmp.ne.s32.totalorder %s93, %s96
      %p105 = scmp.eq.s32.totalorder %s20, 1
      %p106 = por %p104, %p105
      %p107 = scmp.ne.s32.totalorder %s96, %s97
      %p108 = scmp.eq.s32.totalorder %s20, 0
      %p109 = por %p107, %p108
      %p110 = scmp.ne.s32.totalorder %s96, %s97
      %p111 = scmp.eq.s32.totalorder %s21, 1
      %p112 = por %p110, %p111
      %p114 = scmp.ne.s32.totalorder %s97, %s113
      %p115 = scmp.eq.s32.totalorder %s21, 0
      %p116 = por %p114, %p115
      %p117 = scmp.le.s32.totalorder 1, %s15
      %p118 = scmp.lt.s32.totalorder %s15, 3
      %p119 = pnand %p117, %p118
      %p120 = pneg %p119
      // Predicated region
      $region9: #{tpu_custom_call.1} parent=5 // pred_check
        _
      $region10: #{tpu_custom_call.1} parent=5 // pred_check_branch
        %122 = sbr.rel (%p119) target = $region12
      $region11: #{tpu_custom_call.1} parent=5 // pred_region
        %s123 = ssub.s32 %s15, 1
        // Predicated region
        $region13: #{tpu_custom_call.1} parent=11 // pred_check
          %p124 = pneg %p62
        $region14: #{tpu_custom_call.1} parent=11 // pred_check_branch
          %126 = sbr.rel (%p124) target = $region16
        $region15: #{tpu_custom_call.1} parent=11 // pred_region
          _
        $region16: #{tpu_custom_call.1} parent=11 // pred_fallthru
          _
        // Predicated region
        $region17: #{tpu_custom_call.1} parent=11 // pred_check
          %p127 = pneg %p83
        $region18: #{tpu_custom_call.1} parent=11 // pred_check_branch
          %129 = sbr.rel (%p127) target = $region20
        $region19: #{tpu_custom_call.1} parent=11 // pred_region
          _
        $region20: #{tpu_custom_call.1} parent=11 // pred_fallthru
          _
      $region12: #{tpu_custom_call.1} parent=5 // pred_fallthru
        _
      %p130 = scmp.lt.s32.totalorder %s15, 2
      // Predicated region
      $region21: #{tpu_custom_call.1} parent=5 // pred_check
        %p131 = pneg %p130
      $region22: #{tpu_custom_call.1} parent=5 // pred_check_branch
        %133 = sbr.rel (%p131) target = $region24
      $region23: #{tpu_custom_call.1} parent=5 // pred_region
        // Predicated region
        $region25: #{tpu_custom_call.1} parent=23 // pred_check
          %p134 = pneg %p35
        $region26: #{tpu_custom_call.1} parent=23 // pred_check_branch
          %136 = sbr.rel (%p134) target = $region28
        $region27: #{tpu_custom_call.1} parent=23 // pred_region
          %s137 = sand.u32 %s25, 1
          %s138 = scalar_lea.sflag [#allocation3], %s137
          %s139 = sand.u32 %s25, 1
          %s140 = smul.addr %s139, 8
          %s141 = scalar_lea.vmem [#allocation2], %s140
          %s143 = ssub.s32 128, 128
          %144 = vsyncadd %s138, %s143
          %s145 = smul.addr %s15, 128
          %s146 = scalar_lea.hbm %s0, %s145
          %s148 = sshll.u32 %s141, 4
          %s149 = int_to_ptr.vmem [resolvable:$true] %s148
          %151 = dma.hbm_to_vmem [thread:$0]  %s146, 128, %s149, %s138
        $region28: #{tpu_custom_call.1} parent=23 // pred_fallthru
          _
      $region24: #{tpu_custom_call.1} parent=5 // pred_fallthru
        _
      %p152 = scmp.le.s32.totalorder 1, %s15
      %p153 = scmp.lt.s32.totalorder %s15, 3
      %p154 = pnand %p152, %p153
      %p155 = pneg %p154
      // Predicated region
      $region29: #{tpu_custom_call.1} parent=5 // pred_check
        _
      $region30: #{tpu_custom_call.1} parent=5 // pred_check_branch
        %157 = sbr.rel (%p154) target = $region32
      $region31: #{tpu_custom_call.1} parent=5 // pred_region
        %s158 = ssub.s32 %s15, 1
        %s159 = sand.u32 %s28, 1
        %s160 = scalar_lea.sflag [#allocation3], %s159
        %s161 = sand.u32 %s28, 1
        %s162 = smul.addr %s161, 8
        %s163 = scalar_lea.vmem [#allocation2], %s162
        // Predicated region
        $region33: #{tpu_custom_call.1} parent=31 // pred_check
          %p164 = pneg %p41
        $region34: #{tpu_custom_call.1} parent=31 // pred_check_branch
          %166 = sbr.rel (%p164) target = $region36
        $region35: #{tpu_custom_call.1} parent=31 // pred_region
          %167 = dma.done %s160, 128
        $region36: #{tpu_custom_call.1} parent=31 // pred_fallthru
          _
        %s168 = sand.u32 %s28, 1
        %s169 = scalar_lea.sflag [#allocation3], %s168
        %s170 = sand.u32 %s28, 1
        %s171 = smul.addr %s170, 8
        %s172 = scalar_lea.vmem [#allocation2], %s171
        %p173 = pneg %p41
        %p174 = pneg %p38
        %p175 = pneg %p62
        %p176 = pneg %p59
        %p177 = pneg %p83
        %p178 = pneg %p80
        %p179 = pneg %p109
        %p180 = pneg %p106
        %s181 = sand.u32 %s96, 1
        %s182 = scalar_lea.sflag [#allocation4], %s181
        %s183 = sand.u32 %s96, 1
        %s184 = smul.addr %s183, 8
        %s185 = scalar_lea.vmem [#allocation5], %s184
        %v186 = vld [vmem:[%s163] sm:$0xff]
        %187 = vadd.xlane.f32.xlu0 %v186
        %v188 = vpop.xlane.xlu0 %187
        %v189 = vmul.f32 %v186, %v186
        %190 = vadd.xlane.f32.xlu0 %v189
        %v191 = vpop.xlane.xlu0 %190
        %v192 = vmul.f32 %v188, 0.0078125
        %v193 = vmul.f32 %v188, %v192
        %v194 = vsub.f32 %v191, %v193
        %v195 = vmul.f32 %v194, 0.007874016
        %v196 = vmax.f32 %v195, 0.0
        %v197 = vrsqrt.pop %v196
        %v198 = vmul.f32 %v196, %v197
        %vm199 = vcmp.eq.f32.partialorder %v196, inf
        %v200 = vsel %vm199, %v196, %v198
        %vm201 = vcmp.eq.f32.partialorder %v196, 0.0
        %v202 = vand.u32 %v196, 2147483648
        %v203 = vsel %vm201, %v202, %v200
        %v204 = vadd.f32 %v203, 1e-06
        %v205 = vrcp.pop %v204
        %v206 = vmul.f32 %v204, %v205
        %v207 = vsub.f32 2.0, %v206
        %v208 = vmul.f32 %v205, %v207
        %v209 = vld [vmem:[%s1] sm:$0x1]
        %v210 = vld [vmem:[%s2] sm:$0x1]
        %v211 = vsub.f32 %v186, %v192
        %v212 = vmul.f32 %v211, %v208
        %v214 = vlaneseq
        %v215 = vshrl.u32 %v214, 7
        %v216 = vsub.s32 0, %v215
        %v217 = vrot.slane %v209, %v216
        %v219 = vmul.f32 %v212, %v217
        %v221 = vlaneseq
        %v222 = vshrl.u32 %v221, 7
        %v223 = vsub.s32 0, %v222
        %v224 = vrot.slane %v210, %v223
        %v226 = vadd.f32 %v219, %v224
        %227 = vst [vmem:[%s185] sm:$0xff] %v226
        %s228 = sand.u32 %s96, 1
        %s229 = scalar_lea.sflag [#allocation4], %s228
        %s230 = sand.u32 %s96, 1
        %s231 = smul.addr %s230, 8
        %s232 = scalar_lea.vmem [#allocation5], %s231
        // Predicated region
        $region37: #{tpu_custom_call.1} parent=31 // pred_check
          %p233 = pneg %p106
        $region38: #{tpu_custom_call.1} parent=31 // pred_check_branch
          %235 = sbr.rel (%p233) target = $region40
        $region39: #{tpu_custom_call.1} parent=31 // pred_region
          %s237 = ssub.s32 128, 128
          %238 = vsyncadd %s229, %s237
          %s239 = smul.addr %s20, 128
          %s240 = scalar_lea.hbm %s3, %s239
          %s242 = sshll.u32 %s232, 4
          %s243 = int_to_ptr.vmem [resolvable:$true] %s242
          %245 = dma.vmem_to_hbm [thread:$0]  %s243, 128, %s240, %s229
        $region40: #{tpu_custom_call.1} parent=31 // pred_fallthru
          _
      $region32: #{tpu_custom_call.1} parent=5 // pred_fallthru
        _
      %p246 = scmp.le.s32.totalorder 2, %s15
      // Predicated region
      $region41: #{tpu_custom_call.1} parent=5 // pred_check
        %p247 = pneg %p246
      $region42: #{tpu_custom_call.1} parent=5 // pred_check_branch
        %249 = sbr.rel (%p247) target = $region44
      $region43: #{tpu_custom_call.1} parent=5 // pred_region
        %s250 = ssub.s32 %s15, 2
        // Predicated region
        $region45: #{tpu_custom_call.1} parent=43 // pred_check
          %p251 = pneg %p112
        $region46: #{tpu_custom_call.1} parent=43 // pred_check_branch
          %253 = sbr.rel (%p251) target = $region48
        $region47: #{tpu_custom_call.1} parent=43 // pred_region
          %s254 = sand.u32 %s97, 1
          %s255 = scalar_lea.sflag [#allocation4], %s254
          %s256 = sand.u32 %s97, 1
          %s257 = smul.addr %s256, 8
          %s258 = scalar_lea.vmem [#allocation5], %s257
          %259 = dma.done %s255, 128
        $region48: #{tpu_custom_call.1} parent=43 // pred_fallthru
          _
      $region44: #{tpu_custom_call.1} parent=5 // pred_fallthru
        _
    $region6: #{tpu_custom_call.1} parent=1 // loop_footer
      %s19 = sadd.s32 1, %s15
    $region7: #{tpu_custom_call.1} parent=1 // loop_footer_branch
      %14 = sbr.rel target = $region3
    $region8: #{tpu_custom_call.1} parent=1 // loop_exit
      _
    %260 = vsyncpa [#allocation3], 1
    %s261 = scalar_lea.sflag [#allocation3], 1
    %262 = vsyncpa %s261, 1
    %263 = vsyncpa [#allocation4], 1
    %s264 = scalar_lea.sflag [#allocation4], 1
    %265 = vsyncpa %s264, 1

</llo_original>
